<compile_context>
chip_gen: v7x
topology: tpu7x:2x2x1
jax: 0.10.0
libtpu: 0.0.40
codegen_flags: <defaults>
</compile_context>

<pallas_src>
import jax
import jax.numpy as jnp
from jax.experimental import pallas as pl
from jax.experimental.pallas import tpu as pltpu


def _drop_path_kernel(scale_ref, x_ref, o_ref):
    # scale_ref: (TR, 1) f32 per-row scale (mask / keep_prob)
    # x_ref, o_ref: (TR, TS) tiles of the input / output
    x = x_ref[...].astype(jnp.float32)
    o_ref[...] = (x * scale_ref[...]).astype(o_ref.dtype)


def _round_up(v, m):
    return ((v + m - 1) // m) * m


def drop_path_pallas(x, key, p=0.2, training=True):
    """DropPath forward.  x: (N, C, H, W) -> same shape."""
    if not training or p <= 0.0:
        return x  # identity path, no kernel needed

    N, C, H, W = x.shape
    R, S = N * C, H * W
    keep_prob = 1.0 - float(p)

    # Per-(n, c) Bernoulli mask folded with 1/keep_prob into a per-row scale.
    # p/keep_prob never bake into the kernel body, so changing p does not
    # trigger a recompile; the scale array is tiny (R x 1) next to x.
    mask = jax.random.bernoulli(key, keep_prob, (R, 1))
    scale = mask.astype(jnp.float32) * (1.0 / keep_prob)

    x2 = x.reshape(R, S)

    # Large tiles for a bandwidth-bound streaming kernel.
    # TR: multiple of 8 (sublanes), capped at 512 rows.
    # TS: multiple of 128 (lanes), capped at 1024 columns.
    # -> f32 tile <= 2 MiB; 2 in-bufs + 2 out-bufs + scale ~ 8 MiB VMEM.
    TR = min(_round_up(R, 8), 512)
    TS = min(_round_up(S, 128), 1024)
    grid = (pl.cdiv(R, TR), pl.cdiv(S, TS))

    out = pl.pallas_call(
        _drop_path_kernel,
        out_shape=jax.ShapeDtypeStruct((R, S), x.dtype),
        grid_spec=pltpu.PrefetchScalarGridSpec(
            num_scalar_prefetch=0,
            grid=grid,
            in_specs=[
                pl.BlockSpec((TR, 1), lambda i, j: (i, 0)),    # per-row scale
                pl.BlockSpec((TR, TS), lambda i, j: (i, j)),   # x tile
            ],
            out_specs=pl.BlockSpec((TR, TS), lambda i, j: (i, j)),
        ),
        compiler_params=pltpu.CompilerParams(
            dimension_semantics=("parallel", "parallel"),
        ),
    )(scale, x2)

    return out.reshape(N, C, H, W)


def drop_path_ref(x, key, p=0.2, training=True):
    """Pure-JAX reference matching the PyTorch module (same mask key)."""
    if not training or p <= 0.0:
        return x
    N, C, H, W = x.shape
    keep_prob = 1.0 - float(p)
    mask = jax.random.bernoulli(key, keep_prob, (N * C, 1)).astype(jnp.float32)
    mask = mask.reshape(N, C, 1, 1)
    return (x.astype(jnp.float32) * (mask / keep_prob)).astype(x.dtype)


if __name__ == "__main__":
    root = jax.random.PRNGKey(0)
    data_key, mask_key = jax.random.split(root)

    N, C, H, W = 2, 4, 16, 16
    x = jax.random.normal(data_key, (N, C, H, W), dtype=jnp.float32)

    # Training mode: the Pallas kernel runs.
    y = drop_path_pallas(x, mask_key, p=0.2, training=True)
    jax.block_until_ready(y)

    y_ref = drop_path_ref(x, mask_key, p=0.2, training=True)
    assert y.shape == x.shape, y.shape
    assert jnp.allclose(y, y_ref, atol=1e-6, rtol=1e-6), (
        f"max abs err {jnp.max(jnp.abs(y - y_ref))}"
    )

    # Eval mode: identity passthrough (no kernel launch).
    y_eval = drop_path_pallas(x, mask_key, p=0.2, training=False)
    assert jnp.array_equal(y_eval, x)

    print("KERNEL_OK")
</pallas_src>

<mosaic_0001>
module attributes {stable_mosaic.version = 11 : i64} {
  func.func @_drop_path_kernel(%arg0: i32, %arg1: i32, %arg2: memref<8x1xf32, #tpu.memory_space<vmem>>, %arg3: memref<8x256xf32, #tpu.memory_space<vmem>>, %arg4: memref<8x256xf32, #tpu.memory_space<vmem>>) attributes {dimension_semantics = [#tpu.dimension_semantics<parallel>, #tpu.dimension_semantics<parallel>], iteration_bounds = array<i64: 1, 1>, scalar_prefetch = 0 : i64, scratch_operands = 0 : i64, tpu.core_type = #tpu.core_type<tc>, window_params = [{transform_indices = @transform_0, window_bounds = array<i64: 8, 1>}, {transform_indices = @transform_1, window_bounds = array<i64: 8, 256>}, {transform_indices = @transform_2, window_bounds = array<i64: 8, 256>}]} {
    %c0 = arith.constant 0 : index
    %c0_0 = arith.constant 0 : index
    %0 = vector.load %arg3[%c0, %c0_0] : memref<8x256xf32, #tpu.memory_space<vmem>>, vector<8x256xf32>
    %c0_1 = arith.constant 0 : index
    %c0_2 = arith.constant 0 : index
    %1 = vector.load %arg2[%c0_1, %c0_2] : memref<8x1xf32, #tpu.memory_space<vmem>>, vector<8x1xf32>
    %2 = vector.broadcast %1 : vector<8x1xf32> to vector<8x256xf32>
    %3 = arith.mulf %0, %2 : vector<8x256xf32>
    %c0_3 = arith.constant 0 : index
    %c0_4 = arith.constant 0 : index
    %4 = vector.load %arg4[%c0_3, %c0_4] : memref<8x256xf32, #tpu.memory_space<vmem>>, vector<8x256xf32>
    tpu.vector_store %arg4[%c0_3, %c0_4], %3 {strides = array<i32>} : memref<8x256xf32, #tpu.memory_space<vmem>>, vector<8x256xf32>,
    return
  }
  func.func @transform_0(%arg0: i32, %arg1: i32) -> (i32, i32) {
    %c0_i32 = arith.constant 0 : i32
    %c0_i32_0 = arith.constant 0 : i32
    return %arg0, %c0_i32 : i32, i32
  }
  func.func @transform_1(%arg0: i32, %arg1: i32) -> (i32, i32) {
    %c0_i32 = arith.constant 0 : i32
    return %arg0, %arg1 : i32, i32
  }
  func.func @transform_2(%arg0: i32, %arg1: i32) -> (i32, i32) {
    %c0_i32 = arith.constant 0 : i32
    return %arg0, %arg1 : i32, i32
  }
}

</mosaic_0001>

<llo_original>
// kernel: tpu_custom_call.1
$region0: #{tpu_custom_call.1}
  #allocation0 [shape = 'u32[]', space=smem, size = 0x4, offset = 0x4, fixed_abs, tag = 'smem constant byte address 0x4 - core index']
  #allocation1 [shape = 'u32[144,128]{1,0:T(1,128)}', space=vmem, size = 0x12000, scoped, tag = 'internal scratch']
  %s0 = inlined_call_operand.vmem [shape: f32[8,1], index: 0, kind: input, shape index: {}]
  %s1 = inlined_call_operand.hbm [shape: f32[8,256], index: 1, kind: input, shape index: {}]
  %s2 = inlined_call_operand.hbm [shape: f32[8,256], index: 2, kind: output, shape index: {}]
  %s3 = sld [smem:[#allocation0]]
  $region22: #{tpu_custom_call.1} parent=0
    _
  %s5 = ssub.s32 1, %s3
  %s6 = scalar_select 0, %s5, %s3
  $region1: #{tpu_custom_call.1} parent=0
    #allocation2 [shape = 'u8[8192]{0}', space=vmem, size = 0x2000, scoped, tag = 'input window, operand 1, single buffered']
    #allocation3 [shape = 's32[1]{0}', space=sflag, size = 0x4, scoped, tag = 'scoped memory for tpu_custom_call.1']
    #allocation4 [shape = 's32[1]{0}', space=sflag, size = 0x4, scoped, tag = 'scoped memory for tpu_custom_call.1']
    #allocation5 [shape = 'u8[8192]{0}', space=vmem, size = 0x2000, scoped, tag = 'output window, operand 0, single buffered']
    %7 = vsyncpa [#allocation3], 0
    %8 = vsyncpa [#allocation4], 0
    // Predicated region
    $region2: #{tpu_custom_call.1} parent=1 // pred_check
      _
    $region3: #{tpu_custom_call.1} parent=1 // pred_check_branch
      %10 = sbr.rel (0) target = $region5
    $region4: #{tpu_custom_call.1} parent=1 // pred_region
      _
    $region5: #{tpu_custom_call.1} parent=1 // pred_fallthru
      _
    // Predicated region
    $region6: #{tpu_custom_call.1} parent=1 // pred_check
      _
    $region7: #{tpu_custom_call.1} parent=1 // pred_check_branch
      %12 = sbr.rel (0) target = $region9
    $region8: #{tpu_custom_call.1} parent=1 // pred_region
      %s14 = ssub.s32 256, 256
      %15 = vsyncadd [#allocation3], %s14
      %s17 = sshll.u32 [#allocation2], 4
      %s18 = int_to_ptr.vmem [resolvable:$true] %s17
      %20 = dma.hbm_to_vmem [thread:$0]  %s1, 256, %s18, [#allocation3]
    $region9: #{tpu_custom_call.1} parent=1 // pred_fallthru
      _
    // Predicated region
    $region10: #{tpu_custom_call.1} parent=1 // pred_check
      _
    $region11: #{tpu_custom_call.1} parent=1 // pred_check_branch
      %22 = sbr.rel (0) target = $region13
    $region12: #{tpu_custom_call.1} parent=1 // pred_region
      %23 = dma.done [#allocation3], 256
    $region13: #{tpu_custom_call.1} parent=1 // pred_fallthru
      _
    %v24 = vld [vmem:[#allocation2] sm:$0xff]
    %v25 = vld [vmem:[#allocation2 + $0x8] sm:$0xff]
    %v26 = vld [vmem:[%s0] sm:$0xff]
    %28 = vset.pattern.permute.xlu0 0
    %29 = vperm.xlu0 %28, %v26
    %v30 = vpop.permute.xlu0 %29
    %v32 = vmul.f32 %v24, %v30
    %v33 = vmul.f32 %v25, %v30
    %34 = vst [vmem:[#allocation5] sm:$0xff] %v32
    %35 = vst [vmem:[#allocation5 + $0x8] sm:$0xff] %v33
    // Predicated region
    $region14: #{tpu_custom_call.1} parent=1 // pred_check
      _
    $region15: #{tpu_custom_call.1} parent=1 // pred_check_branch
      %37 = sbr.rel (0) target = $region17
    $region16: #{tpu_custom_call.1} parent=1 // pred_region
      %s39 = ssub.s32 256, 256
      %40 = vsyncadd [#allocation4], %s39
      %s42 = sshll.u32 [#allocation5], 4
      %s43 = int_to_ptr.vmem [resolvable:$true] %s42
      %45 = dma.vmem_to_hbm [thread:$0]  %s43, 256, %s2, [#allocation4]
    $region17: #{tpu_custom_call.1} parent=1 // pred_fallthru
      _
    // Predicated region
    $region18: #{tpu_custom_call.1} parent=1 // pred_check
      _
    $region19: #{tpu_custom_call.1} parent=1 // pred_check_branch
      %47 = sbr.rel (0) target = $region21
    $region20: #{tpu_custom_call.1} parent=1 // pred_region
      %48 = dma.done [#allocation4], 256
    $region21: #{tpu_custom_call.1} parent=1 // pred_fallthru
      _
    %49 = vsyncpa [#allocation3], 1
    %50 = vsyncpa [#allocation4], 1

</llo_original>
